<compile_context>
chip_gen: v7x
topology: tpu7x:2x2x1
jax: 0.10.0
libtpu: 0.0.40
codegen_flags: <defaults>
</compile_context>

<pallas_src>
import jax
import jax.numpy as jnp
from jax.experimental import pallas as pl
from jax.experimental.pallas import tpu as pltpu

# ---- model hyper-parameters (spotlight CNNNet defaults, small test sizes) ----
B, S, E = 2, 8, 32          # batch, sequence length, embedding_dim
NUM_ITEMS = 20
KW = 3                      # kernel_width
DIL = 1                     # dilation
PADDING_IDX = 0
RFW = KW + (KW - 1) * (DIL - 1)          # receptive field width of layer 0 (= 3)

# ---- kernel-side layout constants (all sublane(8)-aligned offsets) -----------
SEQ_BLK   = -(-(S + RFW) // 8) * 8       # per-batch padded-seq rows, 8-aligned (16)
EMB_ROWS  = -(-NUM_ITEMS // 8) * 8       # embedding rows padded to 8 (24)
W_OFF     = EMB_ROWS                     # conv-weight block offset in the slab (24)
CB_OFF    = EMB_ROWS + KW * E            # conv-bias row offset (120)
SLAB_ROWS = CB_OFF + 8                   # total slab rows (128)
N_SEQ     = B * SEQ_BLK                  # rows per shifted sequence view (32)
N_IDX     = KW * N_SEQ + B * S           # total gather rows (112)


# ------------------------- fused Pallas kernel -------------------------------
def _cnnnet_fused_kernel(idx_ref, slab_ref, out_ref):
    """Fused CNNNet forward (user_representation + forward).

    idx_ref : (N_IDX, 1) int32
        rows [k*N_SEQ, (k+1)*N_SEQ): padded item sequence shifted left by
        k*DIL (per batch block of SEQ_BLK rows); -1 == causal zero padding.
        rows [KW*N_SEQ, N_IDX): flattened target item ids (row = b*S + s).
    slab_ref: (SLAB_ROWS, E+1) f32
        rows [0, NUM_ITEMS): item embeddings (cols 0..E-1) + item bias (col E)
        rows [W_OFF + k*E, W_OFF + (k+1)*E): conv tap k weights (in, out)
        row  CB_OFF: conv bias.
    out_ref : (B*S, 1) f32 predictions, row index = b*S + s.
    """
    f32 = jnp.float32

    # --- single merged one-hot gather (MXU): KW shifted seq views + targets ---
    # index -1 matches no table row -> exact all-zero embedding (== F.pad).
    onehot = (jax.lax.broadcasted_iota(jnp.int32, (N_IDX, EMB_ROWS), 1)
              == idx_ref[...]).astype(f32)                          # (N_IDX, EMB_ROWS)
    gath = jnp.dot(onehot, slab_ref[0:EMB_ROWS, :],
                   preferred_element_type=f32)                      # (N_IDX, E+1)

    # --- causal conv: KW accumulating dots on 8-aligned row blocks ------------
    conv = jnp.dot(gath[0:N_SEQ, 0:E],
                   slab_ref[W_OFF:W_OFF + E, 0:E],
                   preferred_element_type=f32)                      # (N_SEQ, E)
    for k in range(1, KW):
        conv = conv + jnp.dot(
            gath[k * N_SEQ:(k + 1) * N_SEQ, 0:E],
            slab_ref[W_OFF + k * E:W_OFF + (k + 1) * E, 0:E],
            preferred_element_type=f32)

    # residual = embeddings shifted by RFW-1 == (KW-1)*DIL == last tap's input.
    residual = gath[(KW - 1) * N_SEQ:KW * N_SEQ, 0:E]               # (N_SEQ, E)
    x_all = jnp.tanh(conv + slab_ref[CB_OFF:CB_OFF + 1, 0:E]) + residual

    # --- user representations for steps -1 .. S-2 (x[:, :, :-1]) --------------
    # aligned reshape (SEQ_BLK multiple of 8) + prefix slice, then re-flatten
    # so row order matches the flattened targets (b*S + s).
    user = x_all.reshape(B, SEQ_BLK, E)[:, 0:S, :].reshape(B * S, E)

    # --- predictions = item_bias (col E of gather) + <user, target_emb> -------
    tgt = gath[KW * N_SEQ:, :]                                      # (B*S, E+1)
    out_ref[...] = (tgt[:, E:E + 1]
                    + jnp.sum(user * tgt[:, 0:E], axis=-1, keepdims=True))


# ------------------------- wrapper --------------------------------------------
def cnnnet_forward(item_sequences, targets, emb_weight, item_biases, conv_w, conv_b):
    """Full CNNNet forward (user_representation + forward) in one pallas_call.

    conv_w: (KW, E, E) with layout (tap, in_channel, out_channel)
            (== torch Conv2d weight[:, :, k, 0].T for each tap k).
    """
    assert item_sequences.shape == (B, S) and targets.shape == (B, S)

    # --- int32 index prep: KW causally-shifted views of the padded sequence ---
    seq = item_sequences.astype(jnp.int32)
    pad_len = SEQ_BLK + (KW - 1) * DIL
    padded = jnp.full((B, pad_len), -1, jnp.int32)          # -1 == zero padding
    padded = padded.at[:, RFW:RFW + S].set(seq)
    shifted = [padded[:, k * DIL:k * DIL + SEQ_BLK].reshape(N_SEQ) for k in range(KW)]
    idx = jnp.concatenate(
        shifted + [targets.astype(jnp.int32).reshape(B * S)]).reshape(N_IDX, 1)

    # --- pack ALL f32 params into one sublane/lane-aligned slab (single DMA) --
    slab = jnp.zeros((SLAB_ROWS, E + 1), jnp.float32)
    slab = slab.at[:NUM_ITEMS, :E].set(emb_weight)                       # embeddings
    slab = slab.at[:NUM_ITEMS, E].set(item_biases.reshape(NUM_ITEMS))    # biases
    slab = slab.at[W_OFF:W_OFF + KW * E, :E].set(conv_w.reshape(KW * E, E))
    slab = slab.at[CB_OFF, :E].set(conv_b.reshape(E))

    flops = (2 * N_IDX * EMB_ROWS * (E + 1)      # merged one-hot gather matmul
             + 2 * KW * N_SEQ * E * E            # causal-conv matmuls
             + 6 * N_SEQ * E + 3 * B * S * E)    # bias add / residual / final dot
    cost = pl.CostEstimate(
        flops=flops,
        transcendentals=N_SEQ * E,               # tanh
        bytes_accessed=idx.size * 4 + slab.size * 4 + B * S * 4)

    vmem = pl.BlockSpec(memory_space=pltpu.MemorySpace.VMEM)
    preds = pl.pallas_call(
        _cnnnet_fused_kernel,
        out_shape=jax.ShapeDtypeStruct((B * S, 1), jnp.float32),
        in_specs=[vmem, vmem],
        out_specs=vmem,
        cost_estimate=cost,
    )(idx, slab)
    return preds.reshape(B, S)


# ------------------------- main ------------------------------------------------
if __name__ == "__main__":
    key = jax.random.PRNGKey(0)
    k_emb, k_w, k_b, k_seq, k_tgt = jax.random.split(key, 5)

    # ScaledEmbedding: N(0, 1/E), padding row zeroed.
    emb_weight = jax.random.normal(k_emb, (NUM_ITEMS, E), jnp.float32) / E
    emb_weight = emb_weight.at[PADDING_IDX].set(0.0)
    # ZeroEmbedding biases (zero-init).
    item_biases = jnp.zeros((NUM_ITEMS, 1), jnp.float32)

    # Conv2d(E, E, (KW, 1)) params, PyTorch default kaiming-uniform bound.
    bound = 1.0 / jnp.sqrt(float(E * KW * 1))
    conv_w = jax.random.uniform(k_w, (KW, E, E), jnp.float32, -bound, bound)  # (tap,in,out)
    conv_b = jax.random.uniform(k_b, (1, E), jnp.float32, -bound, bound)

    # Inputs.
    item_sequences = jax.random.randint(k_seq, (B, S), 1, NUM_ITEMS)
    targets = jax.random.randint(k_tgt, (B, S), 1, NUM_ITEMS)

    fwd = jax.jit(cnnnet_forward)
    preds = jax.block_until_ready(
        fwd(item_sequences, targets, emb_weight, item_biases, conv_w, conv_b))

    # ---- pure-JAX reference (mirrors the PyTorch module) ----
    seq_emb = emb_weight[item_sequences]                           # (B, S, E)
    xpad_ref = jnp.pad(seq_emb, ((0, 0), (RFW, 0), (0, 0)))
    residual = jnp.pad(seq_emb, ((0, 0), (1, 0), (0, 0)))
    acc = jnp.zeros((B, S + 1, E), jnp.float32)
    for k in range(KW):
        acc = acc + jnp.einsum('bte,eo->bto',
                               xpad_ref[:, k * DIL:k * DIL + S + 1, :], conv_w[k],
                               precision=jax.lax.Precision.HIGHEST)
    x_ref = jnp.tanh(acc + conv_b) + residual
    user_all = x_ref[:, :-1, :]                                    # steps -1 .. S-2
    target_embedding = emb_weight[targets]
    target_bias = item_biases[targets][..., 0]
    preds_ref = target_bias + jnp.sum(user_all * target_embedding, axis=-1)

    assert jnp.allclose(preds, preds_ref, atol=1e-5, rtol=1e-5), (
        float(jnp.max(jnp.abs(preds - preds_ref))))

    print("KERNEL_OK")
</pallas_src>

<mosaic_0001>
module attributes {stable_mosaic.version = 11 : i64} {
  func.func @_cnnnet_fused_kernel(%arg0: memref<112x1xi32, #tpu.memory_space<vmem>>, %arg1: memref<128x33xf32, #tpu.memory_space<vmem>>, %arg2: memref<16x1xf32, #tpu.memory_space<vmem>>) attributes {dimension_semantics = [], scalar_prefetch = 0 : i64, scratch_operands = 0 : i64, tpu.core_type = #tpu.core_type<tc>} {
    %0 = tpu.iota {dimensions = array<i32: 1>} : vector<112x24xi32>
    %c0 = arith.constant 0 : index
    %c0_0 = arith.constant 0 : index
    %1 = vector.load %arg0[%c0, %c0_0] : memref<112x1xi32, #tpu.memory_space<vmem>>, vector<112x1xi32>
    %2 = vector.broadcast %1 : vector<112x1xi32> to vector<112x24xi32>
    %3 = arith.cmpi eq, %0, %2 : vector<112x24xi32>
    %4 = arith.extui %3 : vector<112x24xi1> to vector<112x24xi32>
    %5 = arith.sitofp %4 : vector<112x24xi32> to vector<112x24xf32>
    %c0_1 = arith.constant 0 : index
    %c0_2 = arith.constant 0 : index
    %6 = vector.load %arg1[%c0_1, %c0_2] : memref<128x33xf32, #tpu.memory_space<vmem>>, vector<24x33xf32>
    %cst = arith.constant dense<0.000000e+00> : vector<112x33xf32>
    %7 = tpu.matmul %5, %6, %cst {dimension_numbers = #tpu.dot_dimension_numbers<[1], [0], [0], [1], [0, 0, 1, 1], [], []>} : vector<112x24xf32>, vector<24x33xf32>, vector<112x33xf32> -> vector<112x33xf32>
    %8 = vector.extract_strided_slice %7 {offsets = [0, 0], sizes = [32, 32], strides = [1, 1]} : vector<112x33xf32> to vector<32x32xf32>
    %c24 = arith.constant 24 : index
    %c0_3 = arith.constant 0 : index
    %9 = vector.load %arg1[%c24, %c0_3] : memref<128x33xf32, #tpu.memory_space<vmem>>, vector<32x32xf32>
    %cst_4 = arith.constant dense<0.000000e+00> : vector<32x32xf32>
    %10 = tpu.matmul %8, %9, %cst_4 {dimension_numbers = #tpu.dot_dimension_numbers<[1], [0], [0], [1], [0, 0, 1, 1], [], []>} : vector<32x32xf32>, vector<32x32xf32>, vector<32x32xf32> -> vector<32x32xf32>
    %11 = vector.extract_strided_slice %7 {offsets = [32, 0], sizes = [32, 32], strides = [1, 1]} : vector<112x33xf32> to vector<32x32xf32>
    %c56 = arith.constant 56 : index
    %c0_5 = arith.constant 0 : index
    %12 = vector.load %arg1[%c56, %c0_5] : memref<128x33xf32, #tpu.memory_space<vmem>>, vector<32x32xf32>
    %cst_6 = arith.constant dense<0.000000e+00> : vector<32x32xf32>
    %13 = tpu.matmul %11, %12, %cst_6 {dimension_numbers = #tpu.dot_dimension_numbers<[1], [0], [0], [1], [0, 0, 1, 1], [], []>} : vector<32x32xf32>, vector<32x32xf32>, vector<32x32xf32> -> vector<32x32xf32>
    %14 = arith.addf %10, %13 : vector<32x32xf32>
    %15 = vector.extract_strided_slice %7 {offsets = [64, 0], sizes = [32, 32], strides = [1, 1]} : vector<112x33xf32> to vector<32x32xf32>
    %c88 = arith.constant 88 : index
    %c0_7 = arith.constant 0 : index
    %16 = vector.load %arg1[%c88, %c0_7] : memref<128x33xf32, #tpu.memory_space<vmem>>, vector<32x32xf32>
    %cst_8 = arith.constant dense<0.000000e+00> : vector<32x32xf32>
    %17 = tpu.matmul %15, %16, %cst_8 {dimension_numbers = #tpu.dot_dimension_numbers<[1], [0], [0], [1], [0, 0, 1, 1], [], []>} : vector<32x32xf32>, vector<32x32xf32>, vector<32x32xf32> -> vector<32x32xf32>
    %18 = arith.addf %14, %17 : vector<32x32xf32>
    %19 = vector.extract_strided_slice %7 {offsets = [64, 0], sizes = [32, 32], strides = [1, 1]} : vector<112x33xf32> to vector<32x32xf32>
    %c120 = arith.constant 120 : index
    %c0_9 = arith.constant 0 : index
    %20 = vector.load %arg1[%c120, %c0_9] : memref<128x33xf32, #tpu.memory_space<vmem>>, vector<1x32xf32>
    %21 = vector.broadcast %20 : vector<1x32xf32> to vector<32x32xf32>
    %22 = arith.addf %18, %21 : vector<32x32xf32>
    %23 = math.tanh %22 : vector<32x32xf32>
    %24 = arith.addf %23, %19 : vector<32x32xf32>
    %25 = vector.shape_cast %24 : vector<32x32xf32> to vector<2x16x32xf32>
    %26 = vector.extract_strided_slice %25 {offsets = [0, 0, 0], sizes = [2, 8, 32], strides = [1, 1, 1]} : vector<2x16x32xf32> to vector<2x8x32xf32>
    %27 = vector.shape_cast %26 : vector<2x8x32xf32> to vector<16x32xf32>
    %28 = vector.extract_strided_slice %7 {offsets = [96, 0], sizes = [16, 33], strides = [1, 1]} : vector<112x33xf32> to vector<16x33xf32>
    %29 = vector.extract_strided_slice %28 {offsets = [0, 32], sizes = [16, 1], strides = [1, 1]} : vector<16x33xf32> to vector<16x1xf32>
    %30 = vector.extract_strided_slice %28 {offsets = [0, 0], sizes = [16, 32], strides = [1, 1]} : vector<16x33xf32> to vector<16x32xf32>
    %31 = arith.mulf %27, %30 : vector<16x32xf32>
    %cst_10 = arith.constant dense<0.000000e+00> : vector<16xf32>
    %32 = vector.multi_reduction <add>, %31, %cst_10 [1] : vector<16x32xf32> to vector<16xf32>
    %33 = vector.shape_cast %32 : vector<16xf32> to vector<16x1xf32>
    %34 = arith.addf %29, %33 : vector<16x1xf32>
    %c0_11 = arith.constant 0 : index
    %c0_12 = arith.constant 0 : index
    %35 = vector.load %arg2[%c0_11, %c0_12] : memref<16x1xf32, #tpu.memory_space<vmem>>, vector<16x1xf32>
    tpu.vector_store %arg2[%c0_11, %c0_12], %34 {strides = array<i32>} : memref<16x1xf32, #tpu.memory_space<vmem>>, vector<16x1xf32>,
    return
  }
}

</mosaic_0001>

<llo_original>
// kernel: cnnnet_forward.1
$region0: #{cnnnet_forward.1}
  #allocation0 [shape = 'u32[]', space=smem, size = 0x4, offset = 0x4, fixed_abs, tag = 'smem constant byte address 0x4 - core index']
  #allocation1 [shape = 'u32[144,128]{1,0:T(1,128)}', space=vmem, size = 0x12000, scoped, tag = 'internal scratch']
  %s0 = inlined_call_operand.vmem [shape: s32[112,1], index: 0, kind: input, shape index: {}]
  %s1 = inlined_call_operand.vmem [shape: f32[128,33], index: 1, kind: input, shape index: {}]
  %s2 = inlined_call_operand.vmem [shape: f32[16,1], index: 2, kind: output, shape index: {}]
  %s3 = sld [smem:[#allocation0]]
  $region18: #{cnnnet_forward.1} parent=0
    _
  %s5 = ssub.s32 1, %s3
  %s6 = scalar_select 0, %s5, %s3
  // Predicated region
  $region2: #{cnnnet_forward.1} parent=0 // pred_check
    _
  $region3: #{cnnnet_forward.1} parent=0 // pred_check_branch
    %8 = sbr.rel (0) target = $region5
  $region4: #{cnnnet_forward.1} parent=0 // pred_region
    _
  $region5: #{cnnnet_forward.1} parent=0 // pred_fallthru
    _
  // Predicated region
  $region6: #{cnnnet_forward.1} parent=0 // pred_check
    _
  $region7: #{cnnnet_forward.1} parent=0 // pred_check_branch
    %10 = sbr.rel (0) target = $region9
  $region8: #{cnnnet_forward.1} parent=0 // pred_region
    _
  $region9: #{cnnnet_forward.1} parent=0 // pred_fallthru
    _
  %v11 = vlaneseq
  %v12 = vand.u32 %v11, 127
  %v13 = vld [vmem:[%s0] sm:$0xff]
  %v14 = vld [vmem:[%s0 + $0x8] sm:$0xff]
  %v15 = vld [vmem:[%s0 + $0x10] sm:$0xff]
  %v16 = vld [vmem:[%s0 + $0x18] sm:$0xff]
  %v17 = vld [vmem:[%s0 + $0x20] sm:$0xff]
  %v18 = vld [vmem:[%s0 + $0x28] sm:$0xff]
  %v19 = vld [vmem:[%s0 + $0x30] sm:$0xff]
  %v20 = vld [vmem:[%s0 + $0x38] sm:$0xff]
  %v21 = vld [vmem:[%s0 + $0x40] sm:$0xff]
  %v22 = vld [vmem:[%s0 + $0x48] sm:$0xff]
  %v23 = vld [vmem:[%s0 + $0x50] sm:$0xff]
  %v24 = vld [vmem:[%s0 + $0x58] sm:$0xff]
  %v25 = vld [vmem:[%s0 + $0x60] sm:$0xff]
  %v26 = vld [vmem:[%s0 + $0x68] sm:$0xff]
  %27 = vset.pattern.permute.xlu0 0
  %28 = vperm.xlu0 %27, %v13
  %v29 = vpop.permute.xlu0 %28
  %30 = vset.pattern.permute.xlu0 0
  %31 = vperm.xlu0 %30, %v14
  %v32 = vpop.permute.xlu0 %31
  %33 = vset.pattern.permute.xlu0 0
  %34 = vperm.xlu0 %33, %v15
  %v35 = vpop.permute.xlu0 %34
  %36 = vset.pattern.permute.xlu0 0
  %37 = vperm.xlu0 %36, %v16
  %v38 = vpop.permute.xlu0 %37
  %39 = vset.pattern.permute.xlu0 0
  %40 = vperm.xlu0 %39, %v17
  %v41 = vpop.permute.xlu0 %40
  %42 = vset.pattern.permute.xlu0 0
  %43 = vperm.xlu0 %42, %v18
  %v44 = vpop.permute.xlu0 %43
  %45 = vset.pattern.permute.xlu0 0
  %46 = vperm.xlu0 %45, %v19
  %v47 = vpop.permute.xlu0 %46
  %48 = vset.pattern.permute.xlu0 0
  %49 = vperm.xlu0 %48, %v20
  %v50 = vpop.permute.xlu0 %49
  %51 = vset.pattern.permute.xlu0 0
  %52 = vperm.xlu0 %51, %v21
  %v53 = vpop.permute.xlu0 %52
  %54 = vset.pattern.permute.xlu0 0
  %55 = vperm.xlu0 %54, %v22
  %v56 = vpop.permute.xlu0 %55
  %57 = vset.pattern.permute.xlu0 0
  %58 = vperm.xlu0 %57, %v23
  %v59 = vpop.permute.xlu0 %58
  %60 = vset.pattern.permute.xlu0 0
  %61 = vperm.xlu0 %60, %v24
  %v62 = vpop.permute.xlu0 %61
  %63 = vset.pattern.permute.xlu0 0
  %64 = vperm.xlu0 %63, %v25
  %v65 = vpop.permute.xlu0 %64
  %66 = vset.pattern.permute.xlu0 0
  %67 = vperm.xlu0 %66, %v26
  %v68 = vpop.permute.xlu0 %67
  %vm69 = vcmp.eq.s32.totalorder %v12, %v29
  %vm70 = vcmp.eq.s32.totalorder %v12, %v32
  %vm71 = vcmp.eq.s32.totalorder %v12, %v35
  %vm72 = vcmp.eq.s32.totalorder %v12, %v38
  %vm73 = vcmp.eq.s32.totalorder %v12, %v41
  %vm74 = vcmp.eq.s32.totalorder %v12, %v44
  %vm75 = vcmp.eq.s32.totalorder %v12, %v47
  %vm76 = vcmp.eq.s32.totalorder %v12, %v50
  %vm77 = vcmp.eq.s32.totalorder %v12, %v53
  %vm78 = vcmp.eq.s32.totalorder %v12, %v56
  %vm79 = vcmp.eq.s32.totalorder %v12, %v59
  %vm80 = vcmp.eq.s32.totalorder %v12, %v62
  %vm81 = vcmp.eq.s32.totalorder %v12, %v65
  %vm82 = vcmp.eq.s32.totalorder %v12, %v68
  %v83 = vsel %vm69, 1, 0
  %v84 = vsel %vm70, 1, 0
  %v85 = vsel %vm71, 1, 0
  %v86 = vsel %vm72, 1, 0
  %v87 = vsel %vm73, 1, 0
  %v88 = vsel %vm74, 1, 0
  %v89 = vsel %vm75, 1, 0
  %v90 = vsel %vm76, 1, 0
  %v91 = vsel %vm77, 1, 0
  %v92 = vsel %vm78, 1, 0
  %v93 = vsel %vm79, 1, 0
  %v94 = vsel %vm80, 1, 0
  %v95 = vsel %vm81, 1, 0
  %v96 = vsel %vm82, 1, 0
  %v97 = vcvt.s32.f32 %v83
  %v98 = vcvt.s32.f32 %v84
  %v99 = vcvt.s32.f32 %v85
  %v100 = vcvt.s32.f32 %v86
  %v101 = vcvt.s32.f32 %v87
  %v102 = vcvt.s32.f32 %v88
  %v103 = vcvt.s32.f32 %v89
  %v104 = vcvt.s32.f32 %v90
  %v105 = vcvt.s32.f32 %v91
  %v106 = vcvt.s32.f32 %v92
  %v107 = vcvt.s32.f32 %v93
  %v108 = vcvt.s32.f32 %v94
  %v109 = vcvt.s32.f32 %v95
  %v110 = vcvt.s32.f32 %v96
  %v111 = vld [vmem:[%s1] sm:$0xff]
  %v112 = vld [vmem:[%s1 + $0x8] sm:$0xff]
  %v113 = vld [vmem:[%s1 + $0x10] sm:$0xff]
  %vm114 = vcmask 195584
  %v116 = vsel %vm114, %v97, 0
  %v119 = vsel %vm114, %v98, 0
  %v122 = vsel %vm114, %v99, 0
  %v125 = vsel %vm114, %v100, 0
  %v128 = vsel %vm114, %v101, 0
  %v131 = vsel %vm114, %v102, 0
  %v134 = vsel %vm114, %v103, 0
  %v137 = vsel %vm114, %v104, 0
  %v140 = vsel %vm114, %v105, 0
  %v143 = vsel %vm114, %v106, 0
  %v146 = vsel %vm114, %v107, 0
  %v149 = vsel %vm114, %v108, 0
  %v152 = vsel %vm114, %v109, 0
  %v155 = vsel %vm114, %v110, 0
  %157 = vmatprep.subr.mxu0 0.0
  %158 = vmatpush1.msra.mxu0 %v111
  %159 = vmatprep.subr.mxu0 0.0
  %160 = vmatpush1.msra.mxu0 %v112
  %161 = vmatprep.subr.mxu0 0.0
  %162 = vmatpush1.msra.mxu0 %v113
  %163 = vmatprep.subr.mxu0 0.0
  %164 = vmatpush1.msra.mxu0 0.0
  %165 = vmatprep.subr.mxu0 0.0
  %166 = vmatpush1.msra.mxu0 0.0
  %167 = vmatprep.subr.mxu0 0.0
  %168 = vmatpush1.msra.mxu0 0.0
  %169 = vmatprep.subr.mxu0 0.0
  %170 = vmatpush1.msra.mxu0 0.0
  %171 = vmatprep.subr.mxu0 0.0
  %172 = vmatpush1.msra.mxu0 0.0
  %173 = vmatprep.subr.mxu0 0.0
  %174 = vmatpush1.msra.mxu0 0.0
  %175 = vmatprep.subr.mxu0 0.0
  %176 = vmatpush1.msra.mxu0 0.0
  %177 = vmatprep.subr.mxu0 0.0
  %178 = vmatpush1.msra.mxu0 0.0
  %179 = vmatprep.subr.mxu0 0.0
  %180 = vmatpush1.msra.mxu0 0.0
  %181 = vmatprep.subr.mxu0 0.0
  %182 = vmatpush1.msra.mxu0 0.0
  %183 = vmatprep.subr.mxu0 0.0
  %184 = vmatpush1.msra.mxu0 0.0
  %185 = vmatprep.subr.mxu0 0.0
  %186 = vmatpush1.msra.mxu0 0.0
  %187 = vmatprep.subr.mxu0 0.0
  %188 = vmatpush1.msra.mxu0 0.0
  %189 = vmatprep.subr.mxu0 0.0
  %190 = vmatpush1.msra.mxu0 0.0
  %191 = vmatprep.subr.mxu0 0.0
  %192 = vmatpush1.msra.mxu0 0.0
  %193 = vmatprep.subr.mxu0 0.0
  %194 = vmatpush1.msra.mxu0 0.0
  %195 = vmatprep.subr.mxu0 0.0
  %196 = vmatpush1.msra.mxu0 0.0
  %197 = vmatprep.subr.mxu0 0.0
  %198 = vmatpush1.msra.mxu0 0.0
  %199 = vmatprep.subr.mxu0 0.0
  %200 = vmatpush1.msra.mxu0 0.0
  %201 = vmatprep.subr.mxu0 0.0
  %202 = vmatpush1.msra.mxu0 0.0
  %203 = vmatprep.subr.mxu0 0.0
  %204 = vmatpush1.msra.mxu0 0.0
  %205 = vmatprep.subr.mxu0 0.0
  %206 = vmatpush1.msra.mxu0 0.0
  %207 = vmatprep.subr.mxu0 0.0
  %208 = vmatpush1.msra.mxu0 0.0
  %209 = vmatprep.subr.mxu0 0.0
  %210 = vmatpush1.msra.mxu0 0.0
  %211 = vmatprep.subr.mxu0 0.0
  %212 = vmatpush1.msra.mxu0 0.0
  %213 = vmatprep.subr.mxu0 0.0
  %214 = vmatpush1.msra.mxu0 0.0
  %215 = vmatprep.subr.mxu0 0.0
  %216 = vmatpush1.msra.mxu0 0.0
  %217 = vmatprep.subr.mxu0 0.0
  %218 = vmatpush1.msra.mxu0 0.0
  %219 = vmatprep.subr.mxu0 0.0
  %220 = vmatpush1.msra.mxu0 0.0
  %221 = vmatprep.mubr.f32.mxu0 0.0
  %222 = vmatmul.mubr.f32.gmra.mrb[0].mxu0 %v116
  %v223 = vpop.f32.mrb[0].mxu0
  %v224 = vadd.f32 0.0, %v223
  %v225 = vpop.f32.mrb[0].mxu0
  %226 = vmatprep.mubr.f32.mxu0 0.0
  %227 = vmatmul.mubr.f32.gmra.mrb[0].mxu0 %v119
  %v228 = vpop.f32.mrb[0].mxu0
  %v229 = vadd.f32 0.0, %v228
  %v230 = vpop.f32.mrb[0].mxu0
  %231 = vmatprep.mubr.f32.mxu0 0.0
  %232 = vmatmul.mubr.f32.gmra.mrb[0].mxu0 %v122
  %v233 = vpop.f32.mrb[0].mxu0
  %v234 = vadd.f32 0.0, %v233
  %v235 = vpop.f32.mrb[0].mxu0
  %236 = vmatprep.mubr.f32.mxu0 0.0
  %237 = vmatmul.mubr.f32.gmra.mrb[0].mxu0 %v125
  %v238 = vpop.f32.mrb[0].mxu0
  %v239 = vadd.f32 0.0, %v238
  %v240 = vpop.f32.mrb[0].mxu0
  %241 = vmatprep.mubr.f32.mxu0 0.0
  %242 = vmatmul.mubr.f32.gmra.mrb[0].mxu0 %v128
  %v243 = vpop.f32.mrb[0].mxu0
  %v244 = vadd.f32 0.0, %v243
  %v245 = vpop.f32.mrb[0].mxu0
  %246 = vmatprep.mubr.f32.mxu0 0.0
  %247 = vmatmul.mubr.f32.gmra.mrb[0].mxu0 %v131
  %v248 = vpop.f32.mrb[0].mxu0
  %v249 = vadd.f32 0.0, %v248
  %v250 = vpop.f32.mrb[0].mxu0
  %251 = vmatprep.mubr.f32.mxu0 0.0
  %252 = vmatmul.mubr.f32.gmra.mrb[0].mxu0 %v134
  %v253 = vpop.f32.mrb[0].mxu0
  %v254 = vadd.f32 0.0, %v253
  %v255 = vpop.f32.mrb[0].mxu0
  %256 = vmatprep.mubr.f32.mxu0 0.0
  %257 = vmatmul.mubr.f32.gmra.mrb[0].mxu0 %v137
  %v258 = vpop.f32.mrb[0].mxu0
  %v259 = vadd.f32 0.0, %v258
  %v260 = vpop.f32.mrb[0].mxu0
  %261 = vmatprep.mubr.f32.mxu0 0.0
  %262 = vmatmul.mubr.f32.gmra.mrb[0].mxu0 %v140
  %v263 = vpop.f32.mrb[0].mxu0
  %v264 = vadd.f32 0.0, %v263
  %v265 = vpop.f32.mrb[0].mxu0
  %266 = vmatprep.mubr.f32.mxu0 0.0
  %267 = vmatmul.mubr.f32.gmra.mrb[0].mxu0 %v143
  %v268 = vpop.f32.mrb[0].mxu0
  %v269 = vadd.f32 0.0, %v268
  %v270 = vpop.f32.mrb[0].mxu0
  %271 = vmatprep.mubr.f32.mxu0 0.0
  %272 = vmatmul.mubr.f32.gmra.mrb[0].mxu0 %v146
  %v273 = vpop.f32.mrb[0].mxu0
  %v274 = vadd.f32 0.0, %v273
  %v275 = vpop.f32.mrb[0].mxu0
  %276 = vmatprep.mubr.f32.mxu0 0.0
  %277 = vmatmul.mubr.f32.gmra.mrb[0].mxu0 %v149
  %v278 = vpop.f32.mrb[0].mxu0
  %v279 = vadd.f32 0.0, %v278
  %v280 = vpop.f32.mrb[0].mxu0
  %281 = vmatprep.mubr.f32.mxu0 0.0
  %282 = vmatmul.mubr.f32.gmra.mrb[0].mxu0 %v152
  %v283 = vpop.f32.mrb[0].mxu0
  %v284 = vadd.f32 0.0, %v283
  %v285 = vpop.f32.mrb[0].mxu0
  %286 = vmatprep.mubr.f32.mxu0 0.0
  %287 = vmatmul.mubr.f32.gmra.mrb[0].mxu0 %v155
  %v288 = vpop.f32.mrb[0].mxu0
  %v289 = vadd.f32 0.0, %v288
  %v290 = vpop.f32.mrb[0].mxu0
  %291 = vdwg.mxu0
  %v292 = vld [vmem:[%s1 + $0x18] sm:$0xff]
  %v293 = vld [vmem:[%s1 + $0x20] sm:$0xff]
  %v294 = vld [vmem:[%s1 + $0x28] sm:$0xff]
  %v295 = vld [vmem:[%s1 + $0x30] sm:$0xff]
  %v296 = vld [vmem:[%s1 + $0x38] sm:$0xff]
  %v297 = vld [vmem:[%s1 + $0x40] sm:$0xff]
  %v298 = vld [vmem:[%s1 + $0x48] sm:$0xff]
  %v299 = vld [vmem:[%s1 + $0x50] sm:$0xff]
  %vm300 = vcmask 261120
  %v302 = vsel %vm300, %v244, 0
  %v305 = vsel %vm300, %v249, 0
  %v308 = vsel %vm300, %v254, 0
  %v311 = vsel %vm300, %v259, 0
  %313 = vmatprep.subr.mxu0 0.0
  %314 = vmatpush1.msra.mxu0 %v296
  %315 = vmatprep.subr.mxu0 0.0
  %316 = vmatpush1.msra.mxu0 %v297
  %317 = vmatprep.subr.mxu0 0.0
  %318 = vmatpush1.msra.mxu0 %v298
  %319 = vmatprep.subr.mxu0 0.0
  %320 = vmatpush1.msra.mxu0 %v299
  %321 = vmatprep.subr.mxu0 0.0
  %322 = vmatpush1.msra.mxu0 0.0
  %323 = vmatprep.subr.mxu0 0.0
  %324 = vmatpush1.msra.mxu0 0.0
  %325 = vmatprep.subr.mxu0 0.0
  %326 = vmatpush1.msra.mxu0 0.0
  %327 = vmatprep.subr.mxu0 0.0
  %328 = vmatpush1.msra.mxu0 0.0
  %329 = vmatprep.subr.mxu0 0.0
  %330 = vmatpush1.msra.mxu0 0.0
  %331 = vmatprep.subr.mxu0 0.0
  %332 = vmatpush1.msra.mxu0 0.0
  %333 = vmatprep.subr.mxu0 0.0
  %334 = vmatpush1.msra.mxu0 0.0
  %335 = vmatprep.subr.mxu0 0.0
  %336 = vmatpush1.msra.mxu0 0.0
  %337 = vmatprep.subr.mxu0 0.0
  %338 = vmatpush1.msra.mxu0 0.0
  %339 = vmatprep.subr.mxu0 0.0
  %340 = vmatpush1.msra.mxu0 0.0
  %341 = vmatprep.subr.mxu0 0.0
  %342 = vmatpush1.msra.mxu0 0.0
  %343 = vmatprep.subr.mxu0 0.0
  %344 = vmatpush1.msra.mxu0 0.0
  %345 = vmatprep.subr.mxu0 0.0
  %346 = vmatpush1.msra.mxu0 0.0
  %347 = vmatprep.subr.mxu0 0.0
  %348 = vmatpush1.msra.mxu0 0.0
  %349 = vmatprep.subr.mxu0 0.0
  %350 = vmatpush1.msra.mxu0 0.0
  %351 = vmatprep.subr.mxu0 0.0
  %352 = vmatpush1.msra.mxu0 0.0
  %353 = vmatprep.subr.mxu0 0.0
  %354 = vmatpush1.msra.mxu0 0.0
  %355 = vmatprep.subr.mxu0 0.0
  %356 = vmatpush1.msra.mxu0 0.0
  %357 = vmatprep.subr.mxu0 0.0
  %358 = vmatpush1.msra.mxu0 0.0
  %359 = vmatprep.subr.mxu0 0.0
  %360 = vmatpush1.msra.mxu0 0.0
  %361 = vmatprep.subr.mxu0 0.0
  %362 = vmatpush1.msra.mxu0 0.0
  %363 = vmatprep.subr.mxu0 0.0
  %364 = vmatpush1.msra.mxu0 0.0
  %365 = vmatprep.subr.mxu0 0.0
  %366 = vmatpush1.msra.mxu0 0.0
  %367 = vmatprep.subr.mxu0 0.0
  %368 = vmatpush1.msra.mxu0 0.0
  %369 = vmatprep.subr.mxu0 0.0
  %370 = vmatpush1.msra.mxu0 0.0
  %371 = vmatprep.subr.mxu0 0.0
  %372 = vmatpush1.msra.mxu0 0.0
  %373 = vmatprep.subr.mxu0 0.0
  %374 = vmatpush1.msra.mxu0 0.0
  %375 = vmatprep.subr.mxu0 0.0
  %376 = vmatpush1.msra.mxu0 0.0
  %377 = vmatprep.mubr.f32.mxu0 0.0
  %378 = vmatmul.mubr.f32.gmra.mrb[0].mxu0 %v302
  %v379 = vpop.f32.mrb[0].mxu0
  %v380 = vadd.f32 0.0, %v379
  %v381 = vpop.f32.mrb[0].mxu0
  %382 = vmatprep.mubr.f32.mxu0 0.0
  %383 = vmatmul.mubr.f32.gmra.mrb[0].mxu0 %v305
  %v384 = vpop.f32.mrb[0].mxu0
  %v385 = vpop.f32.mrb[0].mxu0
  %386 = vmatprep.mubr.f32.mxu0 0.0
  %387 = vmatmul.mubr.f32.gmra.mrb[0].mxu0 %v308
  %v388 = vpop.f32.mrb[0].mxu0
  %v389 = vadd.f32 0.0, %v388
  %v390 = vpop.f32.mrb[0].mxu0
  %391 = vmatprep.mubr.f32.mxu0 0.0
  %392 = vmatmul.mubr.f32.gmra.mrb[0].mxu0 %v311
  %v393 = vpop.f32.mrb[0].mxu0
  %v394 = vpop.f32.mrb[0].mxu0
  %395 = vdwg.mxu0
  %v397 = vsel %vm300, %v224, 0
  %v400 = vsel %vm300, %v229, 0
  %v403 = vsel %vm300, %v234, 0
  %v406 = vsel %vm300, %v239, 0
  %408 = vmatprep.subr.mxu0 0.0
  %409 = vmatpush1.msra.mxu0 %v292
  %410 = vmatprep.subr.mxu0 0.0
  %411 = vmatpush1.msra.mxu0 %v293
  %412 = vmatprep.subr.mxu0 0.0
  %413 = vmatpush1.msra.mxu0 %v294
  %414 = vmatprep.subr.mxu0 0.0
  %415 = vmatpush1.msra.mxu0 %v295
  %416 = vmatprep.subr.mxu0 0.0
  %417 = vmatpush1.msra.mxu0 0.0
  %418 = vmatprep.subr.mxu0 0.0
  %419 = vmatpush1.msra.mxu0 0.0
  %420 = vmatprep.subr.mxu0 0.0
  %421 = vmatpush1.msra.mxu0 0.0
  %422 = vmatprep.subr.mxu0 0.0
  %423 = vmatpush1.msra.mxu0 0.0
  %424 = vmatprep.subr.mxu0 0.0
  %425 = vmatpush1.msra.mxu0 0.0
  %426 = vmatprep.subr.mxu0 0.0
  %427 = vmatpush1.msra.mxu0 0.0
  %428 = vmatprep.subr.mxu0 0.0
  %429 = vmatpush1.msra.mxu0 0.0
  %430 = vmatprep.subr.mxu0 0.0
  %431 = vmatpush1.msra.mxu0 0.0
  %432 = vmatprep.subr.mxu0 0.0
  %433 = vmatpush1.msra.mxu0 0.0
  %434 = vmatprep.subr.mxu0 0.0
  %435 = vmatpush1.msra.mxu0 0.0
  %436 = vmatprep.subr.mxu0 0.0
  %437 = vmatpush1.msra.mxu0 0.0
  %438 = vmatprep.subr.mxu0 0.0
  %439 = vmatpush1.msra.mxu0 0.0
  %440 = vmatprep.subr.mxu0 0.0
  %441 = vmatpush1.msra.mxu0 0.0
  %442 = vmatprep.subr.mxu0 0.0
  %443 = vmatpush1.msra.mxu0 0.0
  %444 = vmatprep.subr.mxu0 0.0
  %445 = vmatpush1.msra.mxu0 0.0
  %446 = vmatprep.subr.mxu0 0.0
  %447 = vmatpush1.msra.mxu0 0.0
  %448 = vmatprep.subr.mxu0 0.0
  %449 = vmatpush1.msra.mxu0 0.0
  %450 = vmatprep.subr.mxu0 0.0
  %451 = vmatpush1.msra.mxu0 0.0
  %452 = vmatprep.subr.mxu0 0.0
  %453 = vmatpush1.msra.mxu0 0.0
  %454 = vmatprep.subr.mxu0 0.0
  %455 = vmatpush1.msra.mxu0 0.0
  %456 = vmatprep.subr.mxu0 0.0
  %457 = vmatpush1.msra.mxu0 0.0
  %458 = vmatprep.subr.mxu0 0.0
  %459 = vmatpush1.msra.mxu0 0.0
  %460 = vmatprep.subr.mxu0 0.0
  %461 = vmatpush1.msra.mxu0 0.0
  %462 = vmatprep.subr.mxu0 0.0
  %463 = vmatpush1.msra.mxu0 0.0
  %464 = vmatprep.subr.mxu0 0.0
  %465 = vmatpush1.msra.mxu0 0.0
  %466 = vmatprep.subr.mxu0 0.0
  %467 = vmatpush1.msra.mxu0 0.0
  %468 = vmatprep.subr.mxu0 0.0
  %469 = vmatpush1.msra.mxu0 0.0
  %470 = vmatprep.subr.mxu0 0.0
  %471 = vmatpush1.msra.mxu0 0.0
  %472 = vmatprep.mubr.f32.mxu0 0.0
  %473 = vmatmul.mubr.f32.gmra.mrb[0].mxu0 %v397
  %v474 = vpop.f32.mrb[0].mxu0
  %v475 = vadd.f32 %v380, %v474
  %v476 = vpop.f32.mrb[0].mxu0
  %477 = vmatprep.mubr.f32.mxu0 0.0
  %478 = vmatmul.mubr.f32.gmra.mrb[0].mxu0 %v400
  %v479 = vpop.f32.mrb[0].mxu0
  %v480 = vpop.f32.mrb[0].mxu0
  %481 = vmatprep.mubr.f32.mxu0 0.0
  %482 = vmatmul.mubr.f32.gmra.mrb[0].mxu0 %v403
  %v483 = vpop.f32.mrb[0].mxu0
  %v484 = vadd.f32 %v389, %v483
  %v485 = vpop.f32.mrb[0].mxu0
  %486 = vmatprep.mubr.f32.mxu0 0.0
  %487 = vmatmul.mubr.f32.gmra.mrb[0].mxu0 %v406
  %v488 = vpop.f32.mrb[0].mxu0
  %v489 = vpop.f32.mrb[0].mxu0
  %490 = vdwg.mxu0
  %v491 = vld [vmem:[%s1 + $0x58] sm:$0xff]
  %v492 = vld [vmem:[%s1 + $0x60] sm:$0xff]
  %v493 = vld [vmem:[%s1 + $0x68] sm:$0xff]
  %v494 = vld [vmem:[%s1 + $0x70] sm:$0xff]
  %v496 = vsel %vm300, %v264, 0
  %v499 = vsel %vm300, %v269, 0
  %v502 = vsel %vm300, %v274, 0
  %v505 = vsel %vm300, %v279, 0
  %507 = vmatprep.subr.mxu0 0.0
  %508 = vmatpush1.msra.mxu0 %v491
  %509 = vmatprep.subr.mxu0 0.0
  %510 = vmatpush1.msra.mxu0 %v492
  %511 = vmatprep.subr.mxu0 0.0
  %512 = vmatpush1.msra.mxu0 %v493
  %513 = vmatprep.subr.mxu0 0.0
  %514 = vmatpush1.msra.mxu0 %v494
  %515 = vmatprep.subr.mxu0 0.0
  %516 = vmatpush1.msra.mxu0 0.0
  %517 = vmatprep.subr.mxu0 0.0
  %518 = vmatpush1.msra.mxu0 0.0
  %519 = vmatprep.subr.mxu0 0.0
  %520 = vmatpush1.msra.mxu0 0.0
  %521 = vmatprep.subr.mxu0 0.0
  %522 = vmatpush1.msra.mxu0 0.0
  %523 = vmatprep.subr.mxu0 0.0
  %524 = vmatpush1.msra.mxu0 0.0
  %525 = vmatprep.subr.mxu0 0.0
  %526 = vmatpush1.msra.mxu0 0.0
  %527 = vmatprep.subr.mxu0 0.0
  %528 = vmatpush1.msra.mxu0 0.0
  %529 = vmatprep.subr.mxu0 0.0
  %530 = vmatpush1.msra.mxu0 0.0
  %531 = vmatprep.subr.mxu0 0.0
  %532 = vmatpush1.msra.mxu0 0.0
  %533 = vmatprep.subr.mxu0 0.0
  %534 = vmatpush1.msra.mxu0 0.0
  %535 = vmatprep.subr.mxu0 0.0
  %536 = vmatpush1.msra.mxu0 0.0
  %537 = vmatprep.subr.mxu0 0.0
  %538 = vmatpush1.msra.mxu0 0.0
  %539 = vmatprep.subr.mxu0 0.0
  %540 = vmatpush1.msra.mxu0 0.0
  %541 = vmatprep.subr.mxu0 0.0
  %542 = vmatpush1.msra.mxu0 0.0
  %543 = vmatprep.subr.mxu0 0.0
  %544 = vmatpush1.msra.mxu0 0.0
  %545 = vmatprep.subr.mxu0 0.0
  %546 = vmatpush1.msra.mxu0 0.0
  %547 = vmatprep.subr.mxu0 0.0
  %548 = vmatpush1.msra.mxu0 0.0
  %549 = vmatprep.subr.mxu0 0.0
  %550 = vmatpush1.msra.mxu0 0.0
  %551 = vmatprep.subr.mxu0 0.0
  %552 = vmatpush1.msra.mxu0 0.0
  %553 = vmatprep.subr.mxu0 0.0
  %554 = vmatpush1.msra.mxu0 0.0
  %555 = vmatprep.subr.mxu0 0.0
  %556 = vmatpush1.msra.mxu0 0.0
  %557 = vmatprep.subr.mxu0 0.0
  %558 = vmatpush1.msra.mxu0 0.0
  %559 = vmatprep.subr.mxu0 0.0
  %560 = vmatpush1.msra.mxu0 0.0
  %561 = vmatprep.subr.mxu0 0.0
  %562 = vmatpush1.msra.mxu0 0.0
  %563 = vmatprep.subr.mxu0 0.0
  %564 = vmatpush1.msra.mxu0 0.0
  %565 = vmatprep.subr.mxu0 0.0
  %566 = vmatpush1.msra.mxu0 0.0
  %567 = vmatprep.subr.mxu0 0.0
  %568 = vmatpush1.msra.mxu0 0.0
  %569 = vmatprep.subr.mxu0 0.0
  %570 = vmatpush1.msra.mxu0 0.0
  %571 = vmatprep.mubr.f32.mxu0 0.0
  %572 = vmatmul.mubr.f32.gmra.mrb[0].mxu0 %v496
  %v573 = vpop.f32.mrb[0].mxu0
  %v574 = vadd.f32 0.0, %v573
  %v575 = vpop.f32.mrb[0].mxu0
  %576 = vmatprep.mubr.f32.mxu0 0.0
  %577 = vmatmul.mubr.f32.gmra.mrb[0].mxu0 %v499
  %v578 = vpop.f32.mrb[0].mxu0
  %v579 = vpop.f32.mrb[0].mxu0
  %580 = vmatprep.mubr.f32.mxu0 0.0
  %581 = vmatmul.mubr.f32.gmra.mrb[0].mxu0 %v502
  %v582 = vpop.f32.mrb[0].mxu0
  %v583 = vadd.f32 0.0, %v582
  %v584 = vpop.f32.mrb[0].mxu0
  %585 = vmatprep.mubr.f32.mxu0 0.0
  %586 = vmatmul.mubr.f32.gmra.mrb[0].mxu0 %v505
  %v587 = vpop.f32.mrb[0].mxu0
  %v588 = vpop.f32.mrb[0].mxu0
  %589 = vdwg.mxu0
  %v590 = vadd.f32 %v475, %v574
  %v591 = vadd.f32 %v484, %v583
  %v592 = vld [vmem:[%s1 + $0x78] sm:$0x1]
  %v593 = vlaneseq
  %v594 = vshrl.u32 %v593, 7
  %v595 = vsub.s32 0, %v594
  %v596 = vrot.slane %v592, %v595
  %v597 = vadd.f32 %v590, %v596
  %v598 = vadd.f32 %v591, %v596
  %v599 = vtanh.pop %v597
  %v600 = vtanh.pop %v598
  %v601 = vadd.f32 %v599, %v264
  %v602 = vadd.f32 %v600, %v274
  %v603 = vmul.f32 %v601, %v284
  %v604 = vmul.f32 %v602, %v289
  %v605 = vsel %vm300, %v603, 0.0
  %606 = vadd.xlane.f32.xlu0 %v605
  %v607 = vpop.xlane.xlu0 %606
  %v608 = vsel %vm300, %v604, 0.0
  %609 = vadd.xlane.f32.xlu0 %v608
  %v610 = vpop.xlane.xlu0 %609
  %v611 = vadd.f32 %v284, %v607
  %v612 = vadd.f32 %v289, %v610
  %615 = vrot.lane.b32.xlu0 %v611, 96
  %v616 = vpop.permute.xlu0 %615
  %617 = vrot.lane.b32.xlu0 %v612, 96
  %v618 = vpop.permute.xlu0 %617
  %vm621 = vcmask 7168
  %622 = vst.msk [vmem:[%s2] sm:$0xff] %vm621, %v616
  %623 = vst.msk [vmem:[%s2 + $0x8] sm:$0xff] %vm621, %v618
  // Predicated region
  $region10: #{cnnnet_forward.1} parent=0 // pred_check
    _
  $region11: #{cnnnet_forward.1} parent=0 // pred_check_branch
    %625 = sbr.rel (0) target = $region13
  $region12: #{cnnnet_forward.1} parent=0 // pred_region
    _
  $region13: #{cnnnet_forward.1} parent=0 // pred_fallthru
    _
  // Predicated region
  $region14: #{cnnnet_forward.1} parent=0 // pred_check
    _
  $region15: #{cnnnet_forward.1} parent=0 // pred_check_branch
    %627 = sbr.rel (0) target = $region17
  $region16: #{cnnnet_forward.1} parent=0 // pred_region
    _
  $region17: #{cnnnet_forward.1} parent=0 // pred_fallthru
    _

</llo_original>
